<compile_context>
chip_gen: v7x
topology: tpu7x:2x2x1
jax: 0.10.0
libtpu: 0.0.40
codegen_flags: <defaults>
</compile_context>

<pallas_src>
import functools

import jax
import jax.numpy as jnp
from jax.experimental import pallas as pl
from jax.experimental.pallas import tpu as pltpu

_LANE = 128  # lane width of every packed slab row


def _align8(n):
    return (n + 7) // 8 * 8


def _slab_offsets(H, lane=_LANE):
    """Static row offsets of the packed weight slab (shared by packer + kernel)."""
    w1_rows = _align8(2 * H + 1)            # [Wih1^T ; Whh1^T ; b1 ; 0-pad]
    w0_off = 0                              # (lane, lane) fused layer-0 block
    w1_off = lane
    fc1_off = _align8(w1_off + w1_rows)     # (H, lane) lane-padded fc1 weight
    bfc1_off = fc1_off + H
    wfc2_off = bfc1_off + 1
    bfc2_off = wfc2_off + 1
    n_rows = _align8(bfc2_off + 1)
    return w0_off, w1_off, w1_rows, fc1_off, bfc1_off, wfc2_off, bfc2_off, n_rows


# ---------------------------------------------------------------------------
# Kernel
# ---------------------------------------------------------------------------
def lstm_pp_kernel(state_ref, w_ref, out_ref, *, hidden_dim, input_width):
    H = hidden_dim
    IN = input_width                        # input_size + 1
    lane = _LANE
    (w0_off, w1_off, w1_rows,
     fc1_off, bfc1_off, wfc2_off, bfc2_off, _) = _slab_offsets(H, lane)

    xh = state_ref[0:1, :]      # (1,lane): [x|t , h_prev(l0), h_prev(l1), 1.0, 0]
    c_prev = state_ref[1:2, :]  # (1,lane): [c_prev(l0), c_prev(l1), 0]

    def cell(gates, cp):
        # Two full-width EUP passes instead of four narrow per-gate ones.
        sig = jax.nn.sigmoid(gates)                 # i, f, o
        th = jnp.tanh(gates)                        # g
        c_new = sig[:, H:2 * H] * cp + sig[:, 0:H] * th[:, 2 * H:3 * H]
        h_new = sig[:, 3 * H:4 * H] * jnp.tanh(c_new)
        return h_new, c_new

    # LSTM layer 0: one fused (1,128)@(128,128) matmul. Bias comes from the
    # constant-1.0 input lane; the h_prev(l1) lanes hit zero weight rows.
    gates0 = jnp.dot(xh, w_ref[w0_off:w0_off + lane, :],
                     preferred_element_type=jnp.float32)
    h1, c1 = cell(gates0, c_prev[:, 0:H])

    # LSTM layer 1: fused [h1 | h_prev(l1) | 1.0 | 0] @ [Wih1^T ; Whh1^T ; b1 ; 0]
    inp1 = jnp.concatenate(
        [h1, xh[:, IN + H:IN + H + (w1_rows - H)]], axis=1)      # (1, w1_rows)
    gates1 = jnp.dot(inp1, w_ref[w1_off:w1_off + w1_rows, :],
                     preferred_element_type=jnp.float32)
    h2, c2 = cell(gates1, c_prev[:, H:2 * H])

    # fc head: Linear(H, H/2) + ReLU on the MXU (lane-padded to 128), then
    # Linear(H/2, 1) on the VPU as mul + lane reduction (bias folded in).
    z = jnp.dot(h2, w_ref[fc1_off:fc1_off + H, :],
                preferred_element_type=jnp.float32) + w_ref[bfc1_off:bfc1_off + 1, :]
    z = jnp.maximum(z, 0.0)
    y = jnp.sum(z * w_ref[wfc2_off:wfc2_off + 1, :]
                + w_ref[bfc2_off:bfc2_off + 1, :], axis=-1, keepdims=True)
    lam = jnp.exp(y)                                             # (1, 1)

    # Single full-width, unmasked store of the whole (8, lane) output tile.
    hc = jnp.concatenate([h1, h2, c1, c2], axis=0)               # (4, H)
    hc_full = jnp.concatenate(
        [hc, jnp.zeros((4, lane - H), jnp.float32)], axis=1)     # (4, lane)
    out_ref[...] = jnp.concatenate(
        [jnp.broadcast_to(lam, (1, lane)), hc_full,
         jnp.zeros((3, lane), jnp.float32)], axis=0)


# ---------------------------------------------------------------------------
# Parameter init / packing
# ---------------------------------------------------------------------------
def init_params(key, input_size, hidden_dim=32, num_layers=2, step=2):
    """PyTorch-layout parameters with nn.LSTM/Linear-style uniform init."""
    H = hidden_dim
    H2 = int(H // step)
    keys = jax.random.split(key, 12)
    k_lstm = 1.0 / float(H) ** 0.5
    k_fc1 = 1.0 / float(H) ** 0.5
    k_fc2 = 1.0 / float(H2) ** 0.5

    def u(kk, shape, bound):
        return jax.random.uniform(kk, shape, jnp.float32, -bound, bound)

    return dict(
        wih0=u(keys[0], (4 * H, input_size + 1), k_lstm),
        whh0=u(keys[1], (4 * H, H), k_lstm),
        bih0=u(keys[2], (4 * H,), k_lstm),
        bhh0=u(keys[3], (4 * H,), k_lstm),
        wih1=u(keys[4], (4 * H, H), k_lstm),
        whh1=u(keys[5], (4 * H, H), k_lstm),
        bih1=u(keys[6], (4 * H,), k_lstm),
        bhh1=u(keys[7], (4 * H,), k_lstm),
        wfc1=u(keys[8], (H2, H), k_fc1),
        bfc1=u(keys[9], (H2,), k_fc1),
        wfc2=u(keys[10], (1, H2), k_fc2),
        bfc2=u(keys[11], (1,), k_fc2),
    )


def pack_weights(p, input_size, hidden_dim, lane=_LANE):
    """Pack all weights/biases into one lane-dense f32 slab (single DMA).
    TODO(synk): on v6e/v7x this slab could be cast to bf16 (MXU-native) to
    halve weight bytes; kept f32 here for bit-tight parity with the reference."""
    H = hidden_dim
    IN = input_size + 1
    G = 4 * H
    assert G <= lane and IN + 2 * H + 1 <= lane
    (w0_off, w1_off, w1_rows,
     fc1_off, bfc1_off, wfc2_off, bfc2_off, n_rows) = _slab_offsets(H, lane)
    assert IN + w1_rows <= lane

    slab = jnp.zeros((n_rows, lane), jnp.float32)

    # Fused layer-0 weight; row index == lane index of the packed input row
    # [x|t , h_prev(l0), h_prev(l1)->0 rows, 1.0 -> bias row, 0...].
    slab = slab.at[w0_off:w0_off + IN, 0:G].set(p["wih0"].T)
    slab = slab.at[w0_off + IN:w0_off + IN + H, 0:G].set(p["whh0"].T)
    slab = slab.at[w0_off + IN + 2 * H, 0:G].set(p["bih0"] + p["bhh0"])

    # Fused layer-1 weight; input is [h1, h_prev(l1), 1.0, 0-pad].
    slab = slab.at[w1_off:w1_off + H, 0:G].set(p["wih1"].T)
    slab = slab.at[w1_off + H:w1_off + 2 * H, 0:G].set(p["whh1"].T)
    slab = slab.at[w1_off + 2 * H, 0:G].set(p["bih1"] + p["bhh1"])

    # fc head, zero-padded to full lane width so intermediates stay lane-dense.
    H2 = p["wfc1"].shape[0]
    slab = slab.at[fc1_off:fc1_off + H, 0:H2].set(p["wfc1"].T)
    slab = slab.at[bfc1_off, 0:H2].set(p["bfc1"])
    slab = slab.at[wfc2_off, 0:H2].set(p["wfc2"][0])
    slab = slab.at[bfc2_off, 0].set(p["bfc2"][0])
    return slab


# ---------------------------------------------------------------------------
# Forward wrapper
# ---------------------------------------------------------------------------
def lstm_point_process_forward(x, t, w_slab, hidden=None, *,
                               input_size, hidden_dim, n_layers=2):
    """Matches LSTMPointProcess.forward(x, t, hidden) for x of shape (1, input_size)."""
    H = hidden_dim
    IN = input_size + 1
    lane = _LANE
    assert 4 * H <= lane and IN + 2 * H + 1 <= lane

    if hidden is None:
        # TODO(synk): PyTorch init_hidden() returns *uninitialized* memory
        # (`weight.new(...)`); we use zeros for a deterministic equivalent.
        h0 = jnp.zeros((n_layers, H), jnp.float32)
        c0 = jnp.zeros((n_layers, H), jnp.float32)
    else:
        h0 = hidden[0].reshape(n_layers, H).astype(jnp.float32)
        c0 = hidden[1].reshape(n_layers, H).astype(jnp.float32)

    # Pack x, t, h0, c0 and the constant bias lane into one (2, 128) slab
    # (replaces torch.cat((x, t)) plus three separate state operands).
    t_val = jnp.asarray(t, jnp.float32).reshape(1, 1)
    row0 = jnp.concatenate(
        [x.astype(jnp.float32), t_val, h0[0:1], h0[1:2],
         jnp.ones((1, 1), jnp.float32),
         jnp.zeros((1, lane - (IN + 2 * H + 1)), jnp.float32)], axis=1)
    row1 = jnp.concatenate(
        [c0[0:1], c0[1:2], jnp.zeros((1, lane - 2 * H), jnp.float32)], axis=1)
    state = jnp.concatenate([row0, row1], axis=0)                 # (2, lane)

    vmem = pl.BlockSpec(memory_space=pltpu.MemorySpace.VMEM)
    kernel = functools.partial(lstm_pp_kernel, hidden_dim=H, input_width=IN)

    out_slab = pl.pallas_call(
        kernel,
        out_shape=jax.ShapeDtypeStruct((8, lane), jnp.float32),
        in_specs=[vmem, vmem],
        out_specs=vmem,
    )(state, w_slab)

    out = out_slab[0:1, 0:1]                                      # (1, 1)
    h_new = out_slab[1:3, 0:H].reshape(n_layers, 1, H)
    c_new = out_slab[3:5, 0:H].reshape(n_layers, 1, H)
    return out, (h_new, c_new)


# ---------------------------------------------------------------------------
# Pure-jnp reference (PyTorch semantics) for correctness checking
# ---------------------------------------------------------------------------
def reference_forward(x, t, p, hidden_dim, n_layers=2, hidden=None):
    H = hidden_dim
    x_cat = jnp.concatenate([x.astype(jnp.float32),
                             jnp.asarray(t, jnp.float32).reshape(1, -1)], axis=1)
    if hidden is None:
        h0 = jnp.zeros((n_layers, H), jnp.float32)
        c0 = jnp.zeros((n_layers, H), jnp.float32)
    else:
        h0 = hidden[0].reshape(n_layers, H)
        c0 = hidden[1].reshape(n_layers, H)

    def cell(inp, hp, cp, wih, whh, bih, bhh):
        g = inp @ wih.T + hp @ whh.T + bih + bhh
        i = jax.nn.sigmoid(g[:, 0:H]); f = jax.nn.sigmoid(g[:, H:2 * H])
        gg = jnp.tanh(g[:, 2 * H:3 * H]); o = jax.nn.sigmoid(g[:, 3 * H:4 * H])
        c = f * cp + i * gg
        return o * jnp.tanh(c), c

    h1, c1 = cell(x_cat, h0[0:1], c0[0:1], p["wih0"], p["whh0"], p["bih0"], p["bhh0"])
    h2, c2 = cell(h1, h0[1:2], c0[1:2], p["wih1"], p["whh1"], p["bih1"], p["bhh1"])
    z = jnp.maximum(h2 @ p["wfc1"].T + p["bfc1"], 0.0)
    y = jnp.exp(z @ p["wfc2"].T + p["bfc2"])
    h_out = jnp.concatenate([h1, h2], axis=0).reshape(n_layers, 1, H)
    c_out = jnp.concatenate([c1, c2], axis=0).reshape(n_layers, 1, H)
    return y, (h_out, c_out)


if __name__ == "__main__":
    key = jax.random.PRNGKey(0)
    kp, kx, kt = jax.random.split(key, 3)

    input_size = 15          # so input_size + 1 = 16 LSTM input features
    hidden_dim = 32          # fc: Linear(32,16)+ReLU -> Linear(16,1)
    params = init_params(kp, input_size, hidden_dim=hidden_dim)
    w_slab = pack_weights(params, input_size, hidden_dim)

    x = jax.random.normal(kx, (1, input_size), jnp.float32)
    t = jax.random.uniform(kt, (), jnp.float32)

    fwd = jax.jit(functools.partial(lstm_point_process_forward,
                                    input_size=input_size, hidden_dim=hidden_dim))
    out, (h_new, c_new) = fwd(x, t, w_slab)
    jax.block_until_ready((out, h_new, c_new))

    ref_out, (ref_h, ref_c) = reference_forward(x, t, params, hidden_dim)
    assert out.shape == (1, 1) and h_new.shape == (2, 1, hidden_dim)
    assert jnp.allclose(out, ref_out, atol=1e-5, rtol=1e-5)
    assert jnp.allclose(h_new, ref_h, atol=1e-5, rtol=1e-5)
    assert jnp.allclose(c_new, ref_c, atol=1e-5, rtol=1e-5)

    print("KERNEL_OK")
</pallas_src>

<mosaic_0001>
module attributes {stable_mosaic.version = 11 : i64} {
  func.func @lstm_pp_kernel(%arg0: memref<2x128xf32, #tpu.memory_space<vmem>>, %arg1: memref<240x128xf32, #tpu.memory_space<vmem>>, %arg2: memref<8x128xf32, #tpu.memory_space<vmem>>) attributes {dimension_semantics = [], scalar_prefetch = 0 : i64, scratch_operands = 0 : i64, tpu.core_type = #tpu.core_type<tc>} {
    %c0 = arith.constant 0 : index
    %c0_0 = arith.constant 0 : index
    %0 = vector.load %arg0[%c0, %c0_0] : memref<2x128xf32, #tpu.memory_space<vmem>>, vector<1x128xf32>
    %c1 = arith.constant 1 : index
    %c0_1 = arith.constant 0 : index
    %1 = vector.load %arg0[%c1, %c0_1] : memref<2x128xf32, #tpu.memory_space<vmem>>, vector<1x128xf32>
    %c0_2 = arith.constant 0 : index
    %c0_3 = arith.constant 0 : index
    %2 = vector.load %arg1[%c0_2, %c0_3] : memref<240x128xf32, #tpu.memory_space<vmem>>, vector<128x128xf32>
    %cst = arith.constant dense<0.000000e+00> : vector<1x128xf32>
    %3 = tpu.matmul %0, %2, %cst {dimension_numbers = #tpu.dot_dimension_numbers<[1], [0], [0], [1], [0, 0, 1, 1], [], []>} : vector<1x128xf32>, vector<128x128xf32>, vector<1x128xf32> -> vector<1x128xf32>
    %4 = vector.extract_strided_slice %1 {offsets = [0, 0], sizes = [1, 32], strides = [1, 1]} : vector<1x128xf32> to vector<1x32xf32>
    %5 = arith.negf %3 : vector<1x128xf32>
    %6 = math.exp %5 : vector<1x128xf32>
    %cst_4 = arith.constant 1.000000e+00 : f32
    %7 = vector.broadcast %cst_4 : f32 to vector<1x128xf32>
    %8 = arith.addf %7, %6 : vector<1x128xf32>
    %9 = arith.divf %7, %8 : vector<1x128xf32>
    %10 = math.tanh %3 : vector<1x128xf32>
    %11 = vector.extract_strided_slice %9 {offsets = [0, 32], sizes = [1, 32], strides = [1, 1]} : vector<1x128xf32> to vector<1x32xf32>
    %12 = arith.mulf %11, %4 : vector<1x32xf32>
    %13 = vector.extract_strided_slice %9 {offsets = [0, 0], sizes = [1, 32], strides = [1, 1]} : vector<1x128xf32> to vector<1x32xf32>
    %14 = vector.extract_strided_slice %10 {offsets = [0, 64], sizes = [1, 32], strides = [1, 1]} : vector<1x128xf32> to vector<1x32xf32>
    %15 = arith.mulf %13, %14 : vector<1x32xf32>
    %16 = arith.addf %12, %15 : vector<1x32xf32>
    %17 = vector.extract_strided_slice %9 {offsets = [0, 96], sizes = [1, 32], strides = [1, 1]} : vector<1x128xf32> to vector<1x32xf32>
    %18 = math.tanh %16 : vector<1x32xf32>
    %19 = arith.mulf %17, %18 : vector<1x32xf32>
    %20 = vector.extract_strided_slice %0 {offsets = [0, 48], sizes = [1, 40], strides = [1, 1]} : vector<1x128xf32> to vector<1x40xf32>
    %21 = tpu.concatenate %19, %20 in 1 : vector<1x32xf32>, vector<1x40xf32> -> vector<1x72xf32>
    %c128 = arith.constant 128 : index
    %c0_5 = arith.constant 0 : index
    %22 = vector.load %arg1[%c128, %c0_5] : memref<240x128xf32, #tpu.memory_space<vmem>>, vector<72x128xf32>
    %cst_6 = arith.constant dense<0.000000e+00> : vector<1x128xf32>
    %23 = tpu.matmul %21, %22, %cst_6 {dimension_numbers = #tpu.dot_dimension_numbers<[1], [0], [0], [1], [0, 0, 1, 1], [], []>} : vector<1x72xf32>, vector<72x128xf32>, vector<1x128xf32> -> vector<1x128xf32>
    %24 = vector.extract_strided_slice %1 {offsets = [0, 32], sizes = [1, 32], strides = [1, 1]} : vector<1x128xf32> to vector<1x32xf32>
    %25 = arith.negf %23 : vector<1x128xf32>
    %26 = math.exp %25 : vector<1x128xf32>
    %cst_7 = arith.constant 1.000000e+00 : f32
    %27 = vector.broadcast %cst_7 : f32 to vector<1x128xf32>
    %28 = arith.addf %27, %26 : vector<1x128xf32>
    %29 = arith.divf %27, %28 : vector<1x128xf32>
    %30 = math.tanh %23 : vector<1x128xf32>
    %31 = vector.extract_strided_slice %29 {offsets = [0, 32], sizes = [1, 32], strides = [1, 1]} : vector<1x128xf32> to vector<1x32xf32>
    %32 = arith.mulf %31, %24 : vector<1x32xf32>
    %33 = vector.extract_strided_slice %29 {offsets = [0, 0], sizes = [1, 32], strides = [1, 1]} : vector<1x128xf32> to vector<1x32xf32>
    %34 = vector.extract_strided_slice %30 {offsets = [0, 64], sizes = [1, 32], strides = [1, 1]} : vector<1x128xf32> to vector<1x32xf32>
    %35 = arith.mulf %33, %34 : vector<1x32xf32>
    %36 = arith.addf %32, %35 : vector<1x32xf32>
    %37 = vector.extract_strided_slice %29 {offsets = [0, 96], sizes = [1, 32], strides = [1, 1]} : vector<1x128xf32> to vector<1x32xf32>
    %38 = math.tanh %36 : vector<1x32xf32>
    %39 = arith.mulf %37, %38 : vector<1x32xf32>
    %c200 = arith.constant 200 : index
    %c0_8 = arith.constant 0 : index
    %40 = vector.load %arg1[%c200, %c0_8] : memref<240x128xf32, #tpu.memory_space<vmem>>, vector<32x128xf32>
    %cst_9 = arith.constant dense<0.000000e+00> : vector<1x128xf32>
    %41 = tpu.matmul %39, %40, %cst_9 {dimension_numbers = #tpu.dot_dimension_numbers<[1], [0], [0], [1], [0, 0, 1, 1], [], []>} : vector<1x32xf32>, vector<32x128xf32>, vector<1x128xf32> -> vector<1x128xf32>
    %c232 = arith.constant 232 : index
    %c0_10 = arith.constant 0 : index
    %42 = vector.load %arg1[%c232, %c0_10] : memref<240x128xf32, #tpu.memory_space<vmem>>, vector<1x128xf32>
    %43 = arith.addf %41, %42 : vector<1x128xf32>
    %cst_11 = arith.constant 0.000000e+00 : f32
    %44 = vector.broadcast %cst_11 : f32 to vector<1x128xf32>
    %45 = arith.maximumf %43, %44 : vector<1x128xf32>
    %c233 = arith.constant 233 : index
    %c0_12 = arith.constant 0 : index
    %46 = vector.load %arg1[%c233, %c0_12] : memref<240x128xf32, #tpu.memory_space<vmem>>, vector<1x128xf32>
    %47 = arith.mulf %45, %46 : vector<1x128xf32>
    %c234 = arith.constant 234 : index
    %c0_13 = arith.constant 0 : index
    %48 = vector.load %arg1[%c234, %c0_13] : memref<240x128xf32, #tpu.memory_space<vmem>>, vector<1x128xf32>
    %49 = arith.addf %47, %48 : vector<1x128xf32>
    %cst_14 = arith.constant dense<0.000000e+00> : vector<1xf32>
    %50 = vector.multi_reduction <add>, %49, %cst_14 [1] : vector<1x128xf32> to vector<1xf32>
    %51 = vector.shape_cast %50 : vector<1xf32> to vector<1x1xf32>
    %52 = math.exp %51 : vector<1x1xf32>
    %53 = tpu.concatenate %19, %39, %16, %36 in 0 : vector<1x32xf32>, vector<1x32xf32>, vector<1x32xf32>, vector<1x32xf32> -> vector<4x32xf32>
    %cst_15 = arith.constant 0.000000e+00 : f32
    %54 = vector.broadcast %cst_15 : f32 to vector<4x96xf32>
    %55 = tpu.concatenate %53, %54 in 1 : vector<4x32xf32>, vector<4x96xf32> -> vector<4x128xf32>
    %56 = vector.shape_cast %52 : vector<1x1xf32> to vector<1x1xf32>
    %57 = vector.broadcast %56 : vector<1x1xf32> to vector<1x128xf32>
    %cst_16 = arith.constant 0.000000e+00 : f32
    %58 = vector.broadcast %cst_16 : f32 to vector<3x128xf32>
    %59 = tpu.concatenate %57, %55, %58 in 0 : vector<1x128xf32>, vector<4x128xf32>, vector<3x128xf32> -> vector<8x128xf32>
    %c0_17 = arith.constant 0 : index
    %c0_18 = arith.constant 0 : index
    %60 = vector.load %arg2[%c0_17, %c0_18] : memref<8x128xf32, #tpu.memory_space<vmem>>, vector<8x128xf32>
    tpu.vector_store %arg2[%c0_17, %c0_18], %59 {strides = array<i32>} : memref<8x128xf32, #tpu.memory_space<vmem>>, vector<8x128xf32>,
    return
  }
}

</mosaic_0001>

<llo_original>
// kernel: lstm_point_process_forward.1
$region0: #{lstm_point_process_forward.1}
  #allocation0 [shape = 'u32[]', space=smem, size = 0x4, offset = 0x4, fixed_abs, tag = 'smem constant byte address 0x4 - core index']
  #allocation1 [shape = 'u32[144,128]{1,0:T(1,128)}', space=vmem, size = 0x12000, scoped, tag = 'internal scratch']
  %s0 = inlined_call_operand.vmem [shape: f32[2,128], index: 0, kind: input, shape index: {}]
  %s1 = inlined_call_operand.hbm [shape: f32[240,128], index: 1, kind: input, shape index: {}]
  %s2 = inlined_call_operand.vmem [shape: f32[8,128], index: 2, kind: output, shape index: {}]
  %s3 = sld [smem:[#allocation0]]
  $region22: #{lstm_point_process_forward.1} parent=0
    _
  %s5 = ssub.s32 1, %s3
  %s6 = scalar_select 0, %s5, %s3
  $region1: #{lstm_point_process_forward.1} parent=0
    #allocation2 [shape = 'u8[122880]{0}', space=vmem, size = 0x1e000, scoped, tag = 'input window, operand 1, single buffered']
    #allocation3 [shape = 's32[1]{0}', space=sflag, size = 0x4, scoped, tag = 'scoped memory for lstm_point_process_forward.1']
    %7 = vsyncpa [#allocation3], 0
    // Predicated region
    $region2: #{lstm_point_process_forward.1} parent=1 // pred_check
      _
    $region3: #{lstm_point_process_forward.1} parent=1 // pred_check_branch
      %9 = sbr.rel (0) target = $region5
    $region4: #{lstm_point_process_forward.1} parent=1 // pred_region
      _
    $region5: #{lstm_point_process_forward.1} parent=1 // pred_fallthru
      _
    // Predicated region
    $region6: #{lstm_point_process_forward.1} parent=1 // pred_check
      _
    $region7: #{lstm_point_process_forward.1} parent=1 // pred_check_branch
      %11 = sbr.rel (0) target = $region9
    $region8: #{lstm_point_process_forward.1} parent=1 // pred_region
      %s13 = ssub.s32 3840, 3840
      %14 = vsyncadd [#allocation3], %s13
      %s15 = sshll.u32 [#allocation2], 4
      %s16 = int_to_ptr.vmem [resolvable:$true] %s15
      %21 = dma.hbm_to_vmem [thread:$0]  %s1, 3840, %s16, [#allocation3], 128, 128, 8
    $region9: #{lstm_point_process_forward.1} parent=1 // pred_fallthru
      _
    // Predicated region
    $region10: #{lstm_point_process_forward.1} parent=1 // pred_check
      _
    $region11: #{lstm_point_process_forward.1} parent=1 // pred_check_branch
      %23 = sbr.rel (0) target = $region13
    $region12: #{lstm_point_process_forward.1} parent=1 // pred_region
      %24 = dma.done [#allocation3], 3840
    $region13: #{lstm_point_process_forward.1} parent=1 // pred_fallthru
      _
    %v25 = vld [vmem:[%s0] sm:$0x1]
    %v26 = vld [vmem:[%s0 + $0x1] sm:$0x1]
    %v27 = vld [vmem:[#allocation2] sm:$0xff]
    %v28 = vld [vmem:[#allocation2 + $0x8] sm:$0xff]
    %v29 = vld [vmem:[#allocation2 + $0x10] sm:$0xff]
    %v30 = vld [vmem:[#allocation2 + $0x18] sm:$0xff]
    %v31 = vld [vmem:[#allocation2 + $0x20] sm:$0xff]
    %v32 = vld [vmem:[#allocation2 + $0x28] sm:$0xff]
    %v33 = vld [vmem:[#allocation2 + $0x30] sm:$0xff]
    %v34 = vld [vmem:[#allocation2 + $0x38] sm:$0xff]
    %v35 = vld [vmem:[#allocation2 + $0x40] sm:$0xff]
    %v36 = vld [vmem:[#allocation2 + $0x48] sm:$0xff]
    %v37 = vld [vmem:[#allocation2 + $0x50] sm:$0xff]
    %v38 = vld [vmem:[#allocation2 + $0x58] sm:$0xff]
    %v39 = vld [vmem:[#allocation2 + $0x60] sm:$0xff]
    %v40 = vld [vmem:[#allocation2 + $0x68] sm:$0xff]
    %v41 = vld [vmem:[#allocation2 + $0x70] sm:$0xff]
    %v42 = vld [vmem:[#allocation2 + $0x78] sm:$0xff]
    %43 = vmatprep.subr.mxu0 0.0
    %44 = vmatpush1.msra.mxu0 %v27
    %45 = vmatprep.subr.mxu0 0.0
    %46 = vmatpush1.msra.mxu0 %v28
    %47 = vmatprep.subr.mxu0 0.0
    %48 = vmatpush1.msra.mxu0 %v29
    %49 = vmatprep.subr.mxu0 0.0
    %50 = vmatpush1.msra.mxu0 %v30
    %51 = vmatprep.subr.mxu0 0.0
    %52 = vmatpush1.msra.mxu0 %v31
    %53 = vmatprep.subr.mxu0 0.0
    %54 = vmatpush1.msra.mxu0 %v32
    %55 = vmatprep.subr.mxu0 0.0
    %56 = vmatpush1.msra.mxu0 %v33
    %57 = vmatprep.subr.mxu0 0.0
    %58 = vmatpush1.msra.mxu0 %v34
    %59 = vmatprep.subr.mxu0 0.0
    %60 = vmatpush1.msra.mxu0 %v35
    %61 = vmatprep.subr.mxu0 0.0
    %62 = vmatpush1.msra.mxu0 %v36
    %63 = vmatprep.subr.mxu0 0.0
    %64 = vmatpush1.msra.mxu0 %v37
    %65 = vmatprep.subr.mxu0 0.0
    %66 = vmatpush1.msra.mxu0 %v38
    %67 = vmatprep.subr.mxu0 0.0
    %68 = vmatpush1.msra.mxu0 %v39
    %69 = vmatprep.subr.mxu0 0.0
    %70 = vmatpush1.msra.mxu0 %v40
    %71 = vmatprep.subr.mxu0 0.0
    %72 = vmatpush1.msra.mxu0 %v41
    %73 = vmatprep.subr.mxu0 0.0
    %74 = vmatpush1.msra.mxu0 %v42
    %75 = vmatprep.subr.mxu0 0.0
    %76 = vmatpush1.msra.mxu0 0.0
    %77 = vmatprep.subr.mxu0 0.0
    %78 = vmatpush1.msra.mxu0 0.0
    %79 = vmatprep.subr.mxu0 0.0
    %80 = vmatpush1.msra.mxu0 0.0
    %81 = vmatprep.subr.mxu0 0.0
    %82 = vmatpush1.msra.mxu0 0.0
    %83 = vmatprep.subr.mxu0 0.0
    %84 = vmatpush1.msra.mxu0 0.0
    %85 = vmatprep.subr.mxu0 0.0
    %86 = vmatpush1.msra.mxu0 0.0
    %87 = vmatprep.subr.mxu0 0.0
    %88 = vmatpush1.msra.mxu0 0.0
    %89 = vmatprep.subr.mxu0 0.0
    %90 = vmatpush1.msra.mxu0 0.0
    %91 = vmatprep.subr.mxu0 0.0
    %92 = vmatpush1.msra.mxu0 0.0
    %93 = vmatprep.subr.mxu0 0.0
    %94 = vmatpush1.msra.mxu0 0.0
    %95 = vmatprep.subr.mxu0 0.0
    %96 = vmatpush1.msra.mxu0 0.0
    %97 = vmatprep.subr.mxu0 0.0
    %98 = vmatpush1.msra.mxu0 0.0
    %99 = vmatprep.subr.mxu0 0.0
    %100 = vmatpush1.msra.mxu0 0.0
    %101 = vmatprep.subr.mxu0 0.0
    %102 = vmatpush1.msra.mxu0 0.0
    %103 = vmatprep.subr.mxu0 0.0
    %104 = vmatpush1.msra.mxu0 0.0
    %105 = vmatprep.subr.mxu0 0.0
    %106 = vmatpush1.msra.mxu0 0.0
    %107 = vmatprep.mubr.f32.mxu0 0.0
    %108 = vmatmul.mubr.f32.gmra.mrb[0].mxu0 %v25
    %v109 = vpop.f32.mrb[0].mxu0
    %v110 = vadd.f32 0.0, %v109
    %v111 = vpop.f32.mrb[0].mxu0
    %112 = vdwg.mxu0
    %v113 = vxor.u32 %v110, 2147483648
    %v114 = vmul.f32 %v113, 1.442695
    %v115 = vpow.pop %v114
    %v116 = vadd.f32 %v115, 1.0
    %v117 = vrcp.pop %v116
    %v118 = vmul.f32 1.0, %v117
    %v119 = vtanh.pop %v110
    %121 = vrot.lane.b32.xlu0 %v26, 32
    %v122 = vpop.permute.xlu0 %121
    %v124 = vmul.f32 %v118, %v122
    %126 = vrot.lane.b32.xlu0 %v119, 64
    %v127 = vpop.permute.xlu0 %126
    %v129 = vmul.f32 %v118, %v127
    %131 = vrot.lane.b32.xlu0 %v129, 32
    %v132 = vpop.permute.xlu0 %131
    %v134 = vadd.f32 %v124, %v132
    %v135 = vtanh.pop %v134
    %137 = vrot.lane.b32.xlu0 %v135, 64
    %v138 = vpop.permute.xlu0 %137
    %v140 = vmul.f32 %v118, %v138
    %142 = vrot.lane.b32.xlu0 %v140, 32
    %v143 = vpop.permute.xlu0 %142
    %146 = vrot.lane.b32.xlu0 %v25, 112
    %v147 = vpop.permute.xlu0 %146
    %vm149 = vcmask 261120
    %v150 = vsel %vm149, %v143, %v147
    %v151 = vld [vmem:[#allocation2 + $0x80] sm:$0xff]
    %v152 = vld [vmem:[#allocation2 + $0x88] sm:$0xff]
    %v153 = vld [vmem:[#allocation2 + $0x90] sm:$0xff]
    %v154 = vld [vmem:[#allocation2 + $0x98] sm:$0xff]
    %v155 = vld [vmem:[#allocation2 + $0xa0] sm:$0xff]
    %v156 = vld [vmem:[#allocation2 + $0xa8] sm:$0xff]
    %v157 = vld [vmem:[#allocation2 + $0xb0] sm:$0xff]
    %v158 = vld [vmem:[#allocation2 + $0xb8] sm:$0xff]
    %v159 = vld [vmem:[#allocation2 + $0xc0] sm:$0xff]
    %vm160 = vcmask 588800
    %v162 = vsel %vm160, %v150, 0
    %164 = vmatprep.subr.mxu0 0.0
    %165 = vmatpush1.msra.mxu0 %v151
    %166 = vmatprep.subr.mxu0 0.0
    %167 = vmatpush1.msra.mxu0 %v152
    %168 = vmatprep.subr.mxu0 0.0
    %169 = vmatpush1.msra.mxu0 %v153
    %170 = vmatprep.subr.mxu0 0.0
    %171 = vmatpush1.msra.mxu0 %v154
    %172 = vmatprep.subr.mxu0 0.0
    %173 = vmatpush1.msra.mxu0 %v155
    %174 = vmatprep.subr.mxu0 0.0
    %175 = vmatpush1.msra.mxu0 %v156
    %176 = vmatprep.subr.mxu0 0.0
    %177 = vmatpush1.msra.mxu0 %v157
    %178 = vmatprep.subr.mxu0 0.0
    %179 = vmatpush1.msra.mxu0 %v158
    %180 = vmatprep.subr.mxu0 0.0
    %181 = vmatpush1.msra.mxu0 %v159
    %182 = vmatprep.subr.mxu0 0.0
    %183 = vmatpush1.msra.mxu0 0.0
    %184 = vmatprep.subr.mxu0 0.0
    %185 = vmatpush1.msra.mxu0 0.0
    %186 = vmatprep.subr.mxu0 0.0
    %187 = vmatpush1.msra.mxu0 0.0
    %188 = vmatprep.subr.mxu0 0.0
    %189 = vmatpush1.msra.mxu0 0.0
    %190 = vmatprep.subr.mxu0 0.0
    %191 = vmatpush1.msra.mxu0 0.0
    %192 = vmatprep.subr.mxu0 0.0
    %193 = vmatpush1.msra.mxu0 0.0
    %194 = vmatprep.subr.mxu0 0.0
    %195 = vmatpush1.msra.mxu0 0.0
    %196 = vmatprep.subr.mxu0 0.0
    %197 = vmatpush1.msra.mxu0 0.0
    %198 = vmatprep.subr.mxu0 0.0
    %199 = vmatpush1.msra.mxu0 0.0
    %200 = vmatprep.subr.mxu0 0.0
    %201 = vmatpush1.msra.mxu0 0.0
    %202 = vmatprep.subr.mxu0 0.0
    %203 = vmatpush1.msra.mxu0 0.0
    %204 = vmatprep.subr.mxu0 0.0
    %205 = vmatpush1.msra.mxu0 0.0
    %206 = vmatprep.subr.mxu0 0.0
    %207 = vmatpush1.msra.mxu0 0.0
    %208 = vmatprep.subr.mxu0 0.0
    %209 = vmatpush1.msra.mxu0 0.0
    %210 = vmatprep.subr.mxu0 0.0
    %211 = vmatpush1.msra.mxu0 0.0
    %212 = vmatprep.subr.mxu0 0.0
    %213 = vmatpush1.msra.mxu0 0.0
    %214 = vmatprep.subr.mxu0 0.0
    %215 = vmatpush1.msra.mxu0 0.0
    %216 = vmatprep.subr.mxu0 0.0
    %217 = vmatpush1.msra.mxu0 0.0
    %218 = vmatprep.subr.mxu0 0.0
    %219 = vmatpush1.msra.mxu0 0.0
    %220 = vmatprep.subr.mxu0 0.0
    %221 = vmatpush1.msra.mxu0 0.0
    %222 = vmatprep.subr.mxu0 0.0
    %223 = vmatpush1.msra.mxu0 0.0
    %224 = vmatprep.subr.mxu0 0.0
    %225 = vmatpush1.msra.mxu0 0.0
    %226 = vmatprep.subr.mxu0 0.0
    %227 = vmatpush1.msra.mxu0 0.0
    %228 = vmatprep.mubr.f32.mxu0 0.0
    %229 = vmatmul.mubr.f32.gmra.mrb[0].mxu0 %v162
    %v230 = vpop.f32.mrb[0].mxu0
    %v231 = vadd.f32 0.0, %v230
    %v232 = vpop.f32.mrb[0].mxu0
    %233 = vdwg.mxu0
    %v234 = vxor.u32 %v231, 2147483648
    %v235 = vmul.f32 %v234, 1.442695
    %v236 = vpow.pop %v235
    %v237 = vadd.f32 %v236, 1.0
    %v238 = vrcp.pop %v237
    %v239 = vmul.f32 1.0, %v238
    %v240 = vtanh.pop %v231
    %v241 = vmul.f32 %v239, %v26
    %243 = vrot.lane.b32.xlu0 %v240, 64
    %v244 = vpop.permute.xlu0 %243
    %v246 = vmul.f32 %v239, %v244
    %248 = vrot.lane.b32.xlu0 %v246, 32
    %v249 = vpop.permute.xlu0 %248
    %v251 = vadd.f32 %v241, %v249
    %v252 = vtanh.pop %v251
    %254 = vrot.lane.b32.xlu0 %v252, 64
    %v255 = vpop.permute.xlu0 %254
    %v257 = vmul.f32 %v239, %v255
    %v258 = vld [vmem:[#allocation2 + $0xc8] sm:$0xff]
    %v259 = vld [vmem:[#allocation2 + $0xd0] sm:$0xff]
    %v260 = vld [vmem:[#allocation2 + $0xd8] sm:$0xff]
    %v261 = vld [vmem:[#allocation2 + $0xe0] sm:$0xff]
    %v262 = vld [vmem:[#allocation2 + $0xe8] sm:$0x1]
    %264 = vrot.lane.b32.xlu0 %v257, 32
    %v265 = vpop.permute.xlu0 %264
    %v266 = vsel %vm149, %v265, 0
    %268 = vmatprep.subr.mxu0 0.0
    %269 = vmatpush1.msra.mxu0 %v258
    %270 = vmatprep.subr.mxu0 0.0
    %271 = vmatpush1.msra.mxu0 %v259
    %272 = vmatprep.subr.mxu0 0.0
    %273 = vmatpush1.msra.mxu0 %v260
    %274 = vmatprep.subr.mxu0 0.0
    %275 = vmatpush1.msra.mxu0 %v261
    %276 = vmatprep.subr.mxu0 0.0
    %277 = vmatpush1.msra.mxu0 0.0
    %278 = vmatprep.subr.mxu0 0.0
    %279 = vmatpush1.msra.mxu0 0.0
    %280 = vmatprep.subr.mxu0 0.0
    %281 = vmatpush1.msra.mxu0 0.0
    %282 = vmatprep.subr.mxu0 0.0
    %283 = vmatpush1.msra.mxu0 0.0
    %284 = vmatprep.subr.mxu0 0.0
    %285 = vmatpush1.msra.mxu0 0.0
    %286 = vmatprep.subr.mxu0 0.0
    %287 = vmatpush1.msra.mxu0 0.0
    %288 = vmatprep.subr.mxu0 0.0
    %289 = vmatpush1.msra.mxu0 0.0
    %290 = vmatprep.subr.mxu0 0.0
    %291 = vmatpush1.msra.mxu0 0.0
    %292 = vmatprep.subr.mxu0 0.0
    %293 = vmatpush1.msra.mxu0 0.0
    %294 = vmatprep.subr.mxu0 0.0
    %295 = vmatpush1.msra.mxu0 0.0
    %296 = vmatprep.subr.mxu0 0.0
    %297 = vmatpush1.msra.mxu0 0.0
    %298 = vmatprep.subr.mxu0 0.0
    %299 = vmatpush1.msra.mxu0 0.0
    %300 = vmatprep.subr.mxu0 0.0
    %301 = vmatpush1.msra.mxu0 0.0
    %302 = vmatprep.subr.mxu0 0.0
    %303 = vmatpush1.msra.mxu0 0.0
    %304 = vmatprep.subr.mxu0 0.0
    %305 = vmatpush1.msra.mxu0 0.0
    %306 = vmatprep.subr.mxu0 0.0
    %307 = vmatpush1.msra.mxu0 0.0
    %308 = vmatprep.subr.mxu0 0.0
    %309 = vmatpush1.msra.mxu0 0.0
    %310 = vmatprep.subr.mxu0 0.0
    %311 = vmatpush1.msra.mxu0 0.0
    %312 = vmatprep.subr.mxu0 0.0
    %313 = vmatpush1.msra.mxu0 0.0
    %314 = vmatprep.subr.mxu0 0.0
    %315 = vmatpush1.msra.mxu0 0.0
    %316 = vmatprep.subr.mxu0 0.0
    %317 = vmatpush1.msra.mxu0 0.0
    %318 = vmatprep.subr.mxu0 0.0
    %319 = vmatpush1.msra.mxu0 0.0
    %320 = vmatprep.subr.mxu0 0.0
    %321 = vmatpush1.msra.mxu0 0.0
    %322 = vmatprep.subr.mxu0 0.0
    %323 = vmatpush1.msra.mxu0 0.0
    %324 = vmatprep.subr.mxu0 0.0
    %325 = vmatpush1.msra.mxu0 0.0
    %326 = vmatprep.subr.mxu0 0.0
    %327 = vmatpush1.msra.mxu0 0.0
    %328 = vmatprep.subr.mxu0 0.0
    %329 = vmatpush1.msra.mxu0 0.0
    %330 = vmatprep.subr.mxu0 0.0
    %331 = vmatpush1.msra.mxu0 0.0
    %332 = vmatprep.mubr.f32.mxu0 0.0
    %333 = vmatmul.mubr.f32.gmra.mrb[0].mxu0 %v266
    %v334 = vpop.f32.mrb[0].mxu0
    %v335 = vadd.f32 %v262, %v334
    %v336 = vpop.f32.mrb[0].mxu0
    %337 = vdwg.mxu0
    %v338 = vmax.f32 %v335, 0.0
    %v339 = vld [vmem:[#allocation2 + $0xe9] sm:$0x1]
    %v340 = vmul.f32 %v338, %v339
    %v341 = vld [vmem:[#allocation2 + $0xea] sm:$0x1]
    %v342 = vadd.f32 %v340, %v341
    %vm343 = vcmask 1040384
    %v344 = vsel %vm343, %v342, 0.0
    %345 = vadd.xlane.f32.xlu0 %v344
    %v346 = vpop.xlane.xlu0 %345
    %v347 = vmul.f32 %v346, 1.442695
    %v348 = vpow.pop %v347
    %v349 = vrot.slane %v257, 7
    %v352 = vrot.slane %v134, 6
    %353 = vrot.lane.b32.xlu0 %v352, 64
    %v354 = vpop.permute.xlu0 %353
    %v357 = vrot.slane %v251, 5
    %358 = vrot.lane.b32.xlu0 %v357, 64
    %v359 = vpop.permute.xlu0 %358
    %v361 = vsel %vm343, %v140, %v349
    %vm362 = vcmask 1041408
    %v363 = vsel %vm362, %v361, %v354
    %vm364 = vcmask 1042432
    %v365 = vsel %vm364, %v363, %v359
    %367 = vrot.lane.b32.xlu0 %v365, 32
    %v368 = vpop.permute.xlu0 %367
    %v370 = vsel %vm149, %v368, 0.0
    %v372 = vrot.slane %v370, 7
    %v374 = vsel %vm343, %v348, %v372
    %vm375 = vcmask 1044480
    %v376 = vsel %vm375, %v374, 0.0
    %377 = vst [vmem:[%s2] sm:$0xff] %v376
    // Predicated region
    $region14: #{lstm_point_process_forward.1} parent=1 // pred_check
      _
    $region15: #{lstm_point_process_forward.1} parent=1 // pred_check_branch
      %379 = sbr.rel (0) target = $region17
    $region16: #{lstm_point_process_forward.1} parent=1 // pred_region
      _
    $region17: #{lstm_point_process_forward.1} parent=1 // pred_fallthru
      _
    // Predicated region
    $region18: #{lstm_point_process_forward.1} parent=1 // pred_check
      _
    $region19: #{lstm_point_process_forward.1} parent=1 // pred_check_branch
      %381 = sbr.rel (0) target = $region21
    $region20: #{lstm_point_process_forward.1} parent=1 // pred_region
      _
    $region21: #{lstm_point_process_forward.1} parent=1 // pred_fallthru
      _
    %382 = vsyncpa [#allocation3], 1

</llo_original>
